<compile_context>
chip_gen: v6e
topology: v6e:2x2x1
jax: 0.10.0
libtpu: 0.0.40
codegen_flags: <defaults>
</compile_context>

<pallas_src>
import jax
import jax.numpy as jnp
from jax.experimental import pallas as pl
from jax.experimental.pallas import tpu as pltpu


def _round_up(x, m):
    return (x + m - 1) // m * m


def _vmem_limit_bytes():
    """Generation-aware VMEM cap: 7/8 of physical VMEM, at most 112 MiB."""
    try:
        cap = pltpu.get_tpu_info().vmem_capacity_bytes
    except Exception:
        cap = 64 * 1024 * 1024   # conservative fallback (v7x-sized)
    return int(min(cap * 7 // 8, 112 * 1024 * 1024))


# ---------------------------------------------------------------------------
# Kernels
# ---------------------------------------------------------------------------

def fnn_fused_kernel(x_ref, w1_ref, b1_ref, w2_ref, b2_ref, out_ref, h_ref):
    """Fused fc1 + decoder.  Grid = (batch tiles, ntoken tiles).

    The hidden activation h is computed once per batch tile (ntoken-tile axis j
    is innermost) and cached in a VMEM scratch (bf16), then re-used for every
    decoder column tile.
    """
    @pl.when(pl.program_id(1) == 0)
    def _():
        h32 = jnp.tanh(
            jnp.dot(x_ref[...], w1_ref[...], preferred_element_type=jnp.float32)
            + b1_ref[...]
        )
        h_ref[...] = h32.astype(h_ref.dtype)

    out_ref[...] = (
        jnp.dot(h_ref[...], w2_ref[...], preferred_element_type=jnp.float32)
        + b2_ref[...]
    ).astype(out_ref.dtype)


def fc1_kernel(x_ref, w1_ref, b1_ref, h_ref):
    """Standalone fc1 (small-batch path): h = tanh(x @ W1 + b1)."""
    h_ref[...] = jnp.tanh(
        jnp.dot(x_ref[...], w1_ref[...], preferred_element_type=jnp.float32)
        + b1_ref[...]
    ).astype(h_ref.dtype)


def decoder_kernel(h_ref, w2_ref, b2_ref, out_ref):
    """Standalone decoder (small-batch path): out = h @ W2_tile + b2_tile."""
    out_ref[...] = (
        jnp.dot(h_ref[...], w2_ref[...], preferred_element_type=jnp.float32)
        + b2_ref[...]
    ).astype(out_ref.dtype)


# ---------------------------------------------------------------------------
# One-time parameter preparation (hoisted out of the per-call path)
# ---------------------------------------------------------------------------

def prepare_fnn_params(emb_table, w1, b1, w2, b2, *, ngram,
                       tile_n=1024, compute_dtype=jnp.bfloat16):
    """Call ONCE at model load, not per forward.

    Transposes weights to (K, N), casts MXU operands to bf16, and zero-pads
    every dimension to a TPU-friendly multiple so the forward path does no
    weight reshaping / casting (removing a full extra HBM read+write of the
    decoder weight per call).
    """
    ninp = emb_table.shape[1]
    F = ngram * ninp
    nhid = w1.shape[0]
    ntoken = w2.shape[0]

    F_p = _round_up(F, 128)                       # lane-dense fc1 contraction
    nhid_p = _round_up(nhid, 128)
    tile_n = min(tile_n, _round_up(ntoken, 128))  # lane-dense output tiles
    ntoken_p = _round_up(ntoken, tile_n)

    # TODO(synk): int8 (v5e/v6e) / fp8-e4m3 (v7x) per-output-channel quantization
    # of W2 would halve decoder HBM bytes; kept bf16 here to preserve numerics.
    w1_t = w1.T.astype(compute_dtype)                       # (F, nhid)
    w2_t = w2.T.astype(compute_dtype)                       # (nhid, ntoken)
    b1_2d = b1.reshape(1, nhid).astype(jnp.float32)
    b2_2d = b2.reshape(1, ntoken).astype(jnp.float32)

    # Zero padding keeps real logits exact: padded h columns are tanh(0)=0 and
    # multiply zero W2 rows; padded ntoken / batch entries are sliced off.
    w1_t = jnp.pad(w1_t, ((0, F_p - F), (0, nhid_p - nhid)))
    w2_t = jnp.pad(w2_t, ((0, nhid_p - nhid), (0, ntoken_p - ntoken)))
    b1_2d = jnp.pad(b1_2d, ((0, 0), (0, nhid_p - nhid)))
    b2_2d = jnp.pad(b2_2d, ((0, 0), (0, ntoken_p - ntoken)))

    return dict(
        emb_table=emb_table,          # kept f32; gathered rows are cast per call
        w1_t=w1_t, b1=b1_2d, w2_t=w2_t, b2=b2_2d,
        ngram=ngram, ninp=ninp, F=F, F_p=F_p, nhid_p=nhid_p,
        ntoken=ntoken, ntoken_p=ntoken_p, tile_n=tile_n,
        compute_dtype=compute_dtype,
    )


# ---------------------------------------------------------------------------
# Forward
# ---------------------------------------------------------------------------

def fnn_forward(tokens, params, *, tile_b=512, out_dtype=jnp.bfloat16):
    """tokens: (B, ngram) int32.  Returns (B, ntoken) logits in out_dtype."""
    B = tokens.shape[0]
    F, F_p = params["F"], params["F_p"]
    nhid_p = params["nhid_p"]
    ntoken, ntoken_p = params["ntoken"], params["ntoken_p"]
    tile_n = params["tile_n"]
    cdt = params["compute_dtype"]

    tile_b = min(tile_b, _round_up(B, 128))      # >=128 rows per MXU pass
    B_p = _round_up(B, tile_b)
    n_bt = B_p // tile_b
    n_nt = ntoken_p // tile_n

    # ---- glue: embedding gather (cast AFTER gather), flatten, pad -----------
    # TODO(synk): dropout (p=0.5) is identity in eval mode; training RNG mask not implemented.
    # TODO(synk): fuse the gather via scalar-prefetched tokens + in-kernel row gather.
    x = jnp.take(params["emb_table"], tokens, axis=0).reshape(B, F).astype(cdt)
    x = jnp.pad(x, ((0, B_p - B), (0, F_p - F)))

    vmem_limit = _vmem_limit_bytes()
    single_buf = pl.Buffered(1)   # grid-invariant operands: one VMEM buffer

    if n_bt >= 2:
        # Fused path: h cached in VMEM scratch and re-used across vocab tiles.
        out = pl.pallas_call(
            fnn_fused_kernel,
            out_shape=jax.ShapeDtypeStruct((B_p, ntoken_p), out_dtype),
            grid_spec=pltpu.PrefetchScalarGridSpec(
                num_scalar_prefetch=0,
                grid=(n_bt, n_nt),
                in_specs=[
                    pl.BlockSpec((tile_b, F_p), lambda i, j: (i, 0)),     # x tile
                    pl.BlockSpec((F_p, nhid_p), lambda i, j: (0, 0),
                                 pipeline_mode=single_buf),               # W1 (invariant)
                    pl.BlockSpec((1, nhid_p), lambda i, j: (0, 0),
                                 pipeline_mode=single_buf),               # b1 (invariant)
                    pl.BlockSpec((nhid_p, tile_n), lambda i, j: (0, j)),  # W2 tile
                    pl.BlockSpec((1, tile_n), lambda i, j: (0, j)),       # b2 tile
                ],
                out_specs=pl.BlockSpec((tile_b, tile_n), lambda i, j: (i, j)),
                scratch_shapes=[pltpu.VMEM((tile_b, nhid_p), cdt)],       # cached h
            ),
            compiler_params=pltpu.CompilerParams(
                dimension_semantics=("parallel", "arbitrary"),
                vmem_limit_bytes=vmem_limit,
            ),
        )(x, params["w1_t"], params["b1"], params["w2_t"], params["b2"])
    else:
        # Small-batch path (single batch tile): compute h in its own tiny call,
        # then run the decoder with no scratch carry so BOTH grid axes are
        # "parallel" -> v7x megacore shards the vocab axis even at tiny B.
        h = pl.pallas_call(
            fc1_kernel,
            out_shape=jax.ShapeDtypeStruct((B_p, nhid_p), cdt),
            grid_spec=pltpu.PrefetchScalarGridSpec(
                num_scalar_prefetch=0,
                grid=(n_bt,),
                in_specs=[
                    pl.BlockSpec((tile_b, F_p), lambda i: (i, 0)),
                    pl.BlockSpec((F_p, nhid_p), lambda i: (0, 0),
                                 pipeline_mode=single_buf),
                    pl.BlockSpec((1, nhid_p), lambda i: (0, 0),
                                 pipeline_mode=single_buf),
                ],
                out_specs=pl.BlockSpec((tile_b, nhid_p), lambda i: (i, 0)),
            ),
            compiler_params=pltpu.CompilerParams(
                dimension_semantics=("parallel",),
                vmem_limit_bytes=vmem_limit,
            ),
        )(x, params["w1_t"], params["b1"])

        out = pl.pallas_call(
            decoder_kernel,
            out_shape=jax.ShapeDtypeStruct((B_p, ntoken_p), out_dtype),
            grid_spec=pltpu.PrefetchScalarGridSpec(
                num_scalar_prefetch=0,
                grid=(n_bt, n_nt),
                in_specs=[
                    pl.BlockSpec((tile_b, nhid_p), lambda i, j: (i, 0)),   # h tile
                    pl.BlockSpec((nhid_p, tile_n), lambda i, j: (0, j)),   # W2 tile
                    pl.BlockSpec((1, tile_n), lambda i, j: (0, j)),        # b2 tile
                ],
                out_specs=pl.BlockSpec((tile_b, tile_n), lambda i, j: (i, j)),
            ),
            compiler_params=pltpu.CompilerParams(
                dimension_semantics=("parallel", "parallel"),
                vmem_limit_bytes=vmem_limit,
            ),
        )(h, params["w2_t"], params["b2"])

    return out[:B, :ntoken]


# ---------------------------------------------------------------------------
# Self-test
# ---------------------------------------------------------------------------

if __name__ == "__main__":
    # Small config consistent with FNNModel(ntoken, ngram, ninp, nhid)
    ntoken, ngram, ninp, nhid = 256, 4, 32, 128
    initrange = 0.1

    key = jax.random.PRNGKey(0)
    k_emb, k_w1, k_b1, k_dec, k_tok1, k_tok2 = jax.random.split(key, 6)

    # Deterministic init mirroring FNNModel.init_weights / nn.Linear defaults.
    emb_table = jax.random.uniform(
        k_emb, (ntoken, ninp), jnp.float32, -initrange, initrange)
    fan_in1 = ninp * ngram
    bound1 = 1.0 / (fan_in1 ** 0.5)
    w1 = jax.random.uniform(k_w1, (nhid, fan_in1), jnp.float32, -bound1, bound1)
    b1 = jax.random.uniform(k_b1, (nhid,), jnp.float32, -bound1, bound1)
    w2 = jax.random.uniform(
        k_dec, (ntoken, nhid), jnp.float32, -initrange, initrange)
    b2 = jnp.zeros((ntoken,), jnp.float32)

    # One-time parameter prep (hoisted out of the per-call path).
    params = prepare_fnn_params(emb_table, w1, b1, w2, b2, ngram=ngram)

    def reference_bf16(tokens):
        # Same bf16-operand / f32-accumulate policy as the kernel.
        xr = jnp.take(emb_table, tokens, axis=0).reshape(tokens.shape[0], fan_in1)
        xr = xr.astype(jnp.bfloat16)
        hr = jnp.tanh(jnp.dot(xr, w1.T.astype(jnp.bfloat16),
                              preferred_element_type=jnp.float32) + b1)
        return jnp.dot(hr.astype(jnp.bfloat16), w2.T.astype(jnp.bfloat16),
                       preferred_element_type=jnp.float32) + b2

    def reference_f32(tokens):
        xr = jnp.take(emb_table, tokens, axis=0).reshape(tokens.shape[0], fan_in1)
        return jnp.tanh(xr @ w1.T + b1) @ w2.T + b2

    # --- small batch: exercises the split (fc1 + decoder, all-parallel) path --
    B1 = 8
    tokens1 = jax.random.randint(k_tok1, (B1, ngram), 0, ntoken, dtype=jnp.int32)
    out1 = jax.block_until_ready(fnn_forward(tokens1, params))   # default bf16 logits
    assert out1.shape == (B1, ntoken) and out1.dtype == jnp.bfloat16
    assert jnp.allclose(out1.astype(jnp.float32), reference_bf16(tokens1),
                        atol=2e-2, rtol=2e-2), "split path mismatch vs bf16 reference"
    assert jnp.allclose(out1.astype(jnp.float32), reference_f32(tokens1),
                        atol=6e-2, rtol=5e-2), "split path mismatch vs f32 reference"

    # --- multi batch-tile: exercises the fused (h-scratch) path ---------------
    B2 = 300
    tokens2 = jax.random.randint(k_tok2, (B2, ngram), 0, ntoken, dtype=jnp.int32)
    out2 = jax.block_until_ready(
        fnn_forward(tokens2, params, tile_b=128, out_dtype=jnp.float32))
    assert out2.shape == (B2, ntoken) and out2.dtype == jnp.float32
    assert jnp.allclose(out2, reference_bf16(tokens2),
                        atol=1e-3, rtol=1e-3), "fused path mismatch vs bf16 reference"
    assert jnp.allclose(out2, reference_f32(tokens2),
                        atol=6e-2, rtol=5e-2), "fused path mismatch vs f32 reference"

    print("KERNEL_OK")
</pallas_src>

<mosaic_0001>
module attributes {stable_mosaic.version = 11 : i64} {
  func.func @fc1_kernel(%arg0: i32, %arg1: memref<128x128xbf16, #tpu.memory_space<vmem>>, %arg2: memref<128x128xbf16, #tpu.memory_space<vmem>>, %arg3: memref<1x128xf32, #tpu.memory_space<vmem>>, %arg4: memref<128x128xbf16, #tpu.memory_space<vmem>>) attributes {dimension_semantics = [#tpu.dimension_semantics<parallel>], iteration_bounds = array<i64: 1>, scalar_prefetch = 0 : i64, scratch_operands = 0 : i64, tpu.core_type = #tpu.core_type<tc>, window_params = [{transform_indices = @transform_0, window_bounds = array<i64: 128, 128>}, {pipeline_mode = #tpu.pipeline_mode<synchronous>, transform_indices = @transform_1, window_bounds = array<i64: 128, 128>}, {pipeline_mode = #tpu.pipeline_mode<synchronous>, transform_indices = @transform_2, window_bounds = array<i64: 1, 128>}, {transform_indices = @transform_3, window_bounds = array<i64: 128, 128>}]} {
    %c0 = arith.constant 0 : index
    %c0_0 = arith.constant 0 : index
    %0 = vector.load %arg1[%c0, %c0_0] : memref<128x128xbf16, #tpu.memory_space<vmem>>, vector<128x128xbf16>
    %c0_1 = arith.constant 0 : index
    %c0_2 = arith.constant 0 : index
    %1 = vector.load %arg2[%c0_1, %c0_2] : memref<128x128xbf16, #tpu.memory_space<vmem>>, vector<128x128xbf16>
    %cst = arith.constant dense<0.000000e+00> : vector<128x128xf32>
    %2 = tpu.matmul %0, %1, %cst {dimension_numbers = #tpu.dot_dimension_numbers<[1], [0], [0], [1], [0, 0, 1, 1], [], []>} : vector<128x128xbf16>, vector<128x128xbf16>, vector<128x128xf32> -> vector<128x128xf32>
    %c0_3 = arith.constant 0 : index
    %c0_4 = arith.constant 0 : index
    %3 = vector.load %arg3[%c0_3, %c0_4] : memref<1x128xf32, #tpu.memory_space<vmem>>, vector<1x128xf32>
    %4 = vector.broadcast %3 : vector<1x128xf32> to vector<128x128xf32>
    %5 = arith.addf %2, %4 : vector<128x128xf32>
    %6 = math.tanh %5 : vector<128x128xf32>
    %7 = arith.truncf %6 : vector<128x128xf32> to vector<128x128xbf16>
    %c0_5 = arith.constant 0 : index
    %c0_6 = arith.constant 0 : index
    %8 = vector.load %arg4[%c0_5, %c0_6] : memref<128x128xbf16, #tpu.memory_space<vmem>>, vector<128x128xbf16>
    tpu.vector_store %arg4[%c0_5, %c0_6], %7 {strides = array<i32>} : memref<128x128xbf16, #tpu.memory_space<vmem>>, vector<128x128xbf16>,
    return
  }
  func.func @transform_0(%arg0: i32) -> (i32, i32) {
    %c0_i32 = arith.constant 0 : i32
    %c0_i32_0 = arith.constant 0 : i32
    return %arg0, %c0_i32 : i32, i32
  }
  func.func @transform_1(%arg0: i32) -> (i32, i32) {
    %c0_i32 = arith.constant 0 : i32
    %c0_i32_0 = arith.constant 0 : i32
    %c0_i32_1 = arith.constant 0 : i32
    return %c0_i32, %c0_i32_0 : i32, i32
  }
  func.func @transform_2(%arg0: i32) -> (i32, i32) {
    %c0_i32 = arith.constant 0 : i32
    %c0_i32_0 = arith.constant 0 : i32
    %c0_i32_1 = arith.constant 0 : i32
    return %c0_i32, %c0_i32_0 : i32, i32
  }
  func.func @transform_3(%arg0: i32) -> (i32, i32) {
    %c0_i32 = arith.constant 0 : i32
    %c0_i32_0 = arith.constant 0 : i32
    return %arg0, %c0_i32 : i32, i32
  }
}

</mosaic_0001>

<llo_original>
// kernel: tpu_custom_call.1
$region0: #{tpu_custom_call.1}
  #allocation0 [shape = 'u32[]', space=smem, size = 0x4, offset = 0x4, fixed_abs, tag = 'smem constant byte address 0x4 - core index']
  #allocation1 [shape = 'u32[144,128]{1,0:T(1,128)}', space=vmem, size = 0x12000, scoped, tag = 'internal scratch']
  %s0 = inlined_call_operand.hbm [shape: bf16[128,128], index: 0, kind: input, shape index: {}]
  %s1 = inlined_call_operand.hbm [shape: bf16[128,128], index: 1, kind: input, shape index: {}]
  %s2 = inlined_call_operand.vmem [shape: f32[1,128], index: 2, kind: input, shape index: {}]
  %s3 = inlined_call_operand.hbm [shape: bf16[128,128], index: 3, kind: output, shape index: {}]
  %s4 = sld [smem:[#allocation0]]
  $region30: #{tpu_custom_call.1} parent=0
    _
  %s6 = ssub.s32 1, %s4
  %s7 = scalar_select 0, %s6, %s4
  $region1: #{tpu_custom_call.1} parent=0
    #allocation2 [shape = 'u8[32768]{0}', space=vmem, size = 0x8000, scoped, tag = 'input window, operand 0, single buffered']
    #allocation3 [shape = 's32[1]{0}', space=sflag, size = 0x4, scoped, tag = 'scoped memory for tpu_custom_call.1']
    #allocation4 [shape = 's32[1]{0}', space=sflag, size = 0x4, scoped, tag = 'scoped memory for tpu_custom_call.1']
    #allocation5 [shape = 'u8[32768]{0}', space=vmem, size = 0x8000, scoped, tag = 'input window, operand 1, single buffered']
    #allocation6 [shape = 's32[1]{0}', space=sflag, size = 0x4, scoped, tag = 'scoped memory for tpu_custom_call.1']
    #allocation7 [shape = 'u8[32768]{0}', space=vmem, size = 0x8000, scoped, tag = 'output window, operand 0, single buffered']
    %8 = vsyncpa [#allocation3], 0
    %9 = vsyncpa [#allocation6], 0
    %10 = vsyncpa [#allocation4], 0
    // Predicated region
    $region2: #{tpu_custom_call.1} parent=1 // pred_check
      _
    $region3: #{tpu_custom_call.1} parent=1 // pred_check_branch
      %12 = sbr.rel (0) target = $region5
    $region4: #{tpu_custom_call.1} parent=1 // pred_region
      %s14 = ssub.s32 1024, 1024
      %15 = vsyncadd [#allocation3], %s14
      %s16 = sshll.u32 [#allocation2], 4
      %s17 = int_to_ptr.vmem [resolvable:$true] %s16
      %22 = dma.hbm_to_vmem [thread:$0]  %s0, 1024, %s17, [#allocation3], 64, 64, 4
    $region5: #{tpu_custom_call.1} parent=1 // pred_fallthru
      _
    // Predicated region
    $region6: #{tpu_custom_call.1} parent=1 // pred_check
      _
    $region7: #{tpu_custom_call.1} parent=1 // pred_check_branch
      %24 = sbr.rel (0) target = $region9
    $region8: #{tpu_custom_call.1} parent=1 // pred_region
      %s26 = ssub.s32 1024, 1024
      %27 = vsyncadd [#allocation6], %s26
      %s28 = sshll.u32 [#allocation5], 4
      %s29 = int_to_ptr.vmem [resolvable:$true] %s28
      %34 = dma.hbm_to_vmem [thread:$0]  %s1, 1024, %s29, [#allocation6], 64, 64, 4
    $region9: #{tpu_custom_call.1} parent=1 // pred_fallthru
      _
    // Predicated region
    $region10: #{tpu_custom_call.1} parent=1 // pred_check
      _
    $region11: #{tpu_custom_call.1} parent=1 // pred_check_branch
      %36 = sbr.rel (0) target = $region13
    $region12: #{tpu_custom_call.1} parent=1 // pred_region
      _
    $region13: #{tpu_custom_call.1} parent=1 // pred_fallthru
      _
    // Predicated region
    $region14: #{tpu_custom_call.1} parent=1 // pred_check
      _
    $region15: #{tpu_custom_call.1} parent=1 // pred_check_branch
      %38 = sbr.rel (0) target = $region17
    $region16: #{tpu_custom_call.1} parent=1 // pred_region
      %39 = dma.done [#allocation3], 1024
    $region17: #{tpu_custom_call.1} parent=1 // pred_fallthru
      _
    // Predicated region
    $region18: #{tpu_custom_call.1} parent=1 // pred_check
      _
    $region19: #{tpu_custom_call.1} parent=1 // pred_check_branch
      %41 = sbr.rel (0) target = $region21
    $region20: #{tpu_custom_call.1} parent=1 // pred_region
      %42 = dma.done [#allocation6], 1024
    $region21: #{tpu_custom_call.1} parent=1 // pred_fallthru
      _
    %v44 = vld [vmem:[#allocation2] sm:$0xf]
    %v45 = vld [vmem:[#allocation2 + $0x4] sm:$0xf]
    %v46 = vld [vmem:[#allocation2 + $0x8] sm:$0xf]
    %v47 = vld [vmem:[#allocation2 + $0xc] sm:$0xf]
    %v48 = vld [vmem:[#allocation2 + $0x10] sm:$0xf]
    %v49 = vld [vmem:[#allocation2 + $0x14] sm:$0xf]
    %v50 = vld [vmem:[#allocation2 + $0x18] sm:$0xf]
    %v51 = vld [vmem:[#allocation2 + $0x1c] sm:$0xf]
    %v52 = vld [vmem:[#allocation2 + $0x20] sm:$0xf]
    %v53 = vld [vmem:[#allocation2 + $0x24] sm:$0xf]
    %v54 = vld [vmem:[#allocation2 + $0x28] sm:$0xf]
    %v55 = vld [vmem:[#allocation2 + $0x2c] sm:$0xf]
    %v56 = vld [vmem:[#allocation2 + $0x30] sm:$0xf]
    %v57 = vld [vmem:[#allocation2 + $0x34] sm:$0xf]
    %v58 = vld [vmem:[#allocation2 + $0x38] sm:$0xf]
    %v59 = vld [vmem:[#allocation2 + $0x3c] sm:$0xf]
    %v60 = vld [vmem:[#allocation5] sm:$0xf]
    %v61 = vld [vmem:[#allocation5 + $0x4] sm:$0xf]
    %v62 = vld [vmem:[#allocation5 + $0x8] sm:$0xf]
    %v63 = vld [vmem:[#allocation5 + $0xc] sm:$0xf]
    %v64 = vld [vmem:[#allocation5 + $0x10] sm:$0xf]
    %v65 = vld [vmem:[#allocation5 + $0x14] sm:$0xf]
    %v66 = vld [vmem:[#allocation5 + $0x18] sm:$0xf]
    %v67 = vld [vmem:[#allocation5 + $0x1c] sm:$0xf]
    %v68 = vld [vmem:[#allocation5 + $0x20] sm:$0xf]
    %v69 = vld [vmem:[#allocation5 + $0x24] sm:$0xf]
    %v70 = vld [vmem:[#allocation5 + $0x28] sm:$0xf]
    %v71 = vld [vmem:[#allocation5 + $0x2c] sm:$0xf]
    %v72 = vld [vmem:[#allocation5 + $0x30] sm:$0xf]
    %v73 = vld [vmem:[#allocation5 + $0x34] sm:$0xf]
    %v74 = vld [vmem:[#allocation5 + $0x38] sm:$0xf]
    %v75 = vld [vmem:[#allocation5 + $0x3c] sm:$0xf]
    %v76 = vld [vmem:[%s2] sm:$0x1]
    %v78 = vlaneseq
    %v79 = vshrl.u32 %v78, 7
    %v80 = vsub.s32 0, %v79
    %v81 = vrot.slane %v76, %v80
    %v99 = vunpack.c.l.b16 %v44
    %v100 = vunpack.c.l.b16 %v45
    %v101 = vunpack.c.l.b16 %v46
    %v102 = vunpack.c.l.b16 %v47
    %v103 = vunpack.c.l.b16 %v48
    %v104 = vunpack.c.l.b16 %v49
    %v105 = vunpack.c.l.b16 %v50
    %v106 = vunpack.c.l.b16 %v51
    %v107 = vunpack.c.l.b16 %v52
    %v108 = vunpack.c.l.b16 %v53
    %v109 = vunpack.c.l.b16 %v54
    %v110 = vunpack.c.l.b16 %v55
    %v111 = vunpack.c.l.b16 %v56
    %v112 = vunpack.c.l.b16 %v57
    %v113 = vunpack.c.l.b16 %v58
    %v114 = vunpack.c.l.b16 %v59
    %v115 = vpack.c.b16 %v100, %v99
    %v116 = vpack.c.b16 %v102, %v101
    %v117 = vpack.c.b16 %v104, %v103
    %v118 = vpack.c.b16 %v106, %v105
    %v119 = vpack.c.b16 %v108, %v107
    %v120 = vpack.c.b16 %v110, %v109
    %v121 = vpack.c.b16 %v112, %v111
    %v122 = vpack.c.b16 %v114, %v113
    %v147 = vunpack.c.l.b16 %v60
    %v148 = vunpack.c.l.b16 %v61
    %v149 = vunpack.c.l.b16 %v62
    %v150 = vunpack.c.l.b16 %v63
    %v151 = vunpack.c.l.b16 %v64
    %v152 = vunpack.c.l.b16 %v65
    %v153 = vunpack.c.l.b16 %v66
    %v154 = vunpack.c.l.b16 %v67
    %v155 = vunpack.c.l.b16 %v68
    %v156 = vunpack.c.l.b16 %v69
    %v157 = vunpack.c.l.b16 %v70
    %v158 = vunpack.c.l.b16 %v71
    %v159 = vunpack.c.l.b16 %v72
    %v160 = vunpack.c.l.b16 %v73
    %v161 = vunpack.c.l.b16 %v74
    %v162 = vunpack.c.l.b16 %v75
    %v163 = vpack.c.b16 %v148, %v147
    %v164 = vpack.c.b16 %v150, %v149
    %v165 = vpack.c.b16 %v152, %v151
    %v166 = vpack.c.b16 %v154, %v153
    %v167 = vpack.c.b16 %v156, %v155
    %v168 = vpack.c.b16 %v158, %v157
    %v169 = vpack.c.b16 %v160, %v159
    %v170 = vpack.c.b16 %v162, %v161
    %179 = vmatprep.subr.bf16.mxu0 0
    %180 = vmatpush1.bf16.msra.mxu0 %v170
    %181 = vmatprep.subr.bf16.mxu0 0
    %182 = vmatpush1.bf16.msra.mxu0 %v169
    %183 = vmatprep.subr.bf16.mxu0 0
    %184 = vmatpush1.bf16.msra.mxu0 %v168
    %185 = vmatprep.subr.bf16.mxu0 0
    %186 = vmatpush1.bf16.msra.mxu0 %v167
    %187 = vmatprep.subr.bf16.mxu0 0
    %188 = vmatpush1.bf16.msra.mxu0 %v166
    %189 = vmatprep.subr.bf16.mxu0 0
    %190 = vmatpush1.bf16.msra.mxu0 %v165
    %191 = vmatprep.subr.bf16.mxu0 0
    %192 = vmatpush1.bf16.msra.mxu0 %v164
    %193 = vmatprep.subr.bf16.mxu0 0
    %194 = vmatpush1.bf16.msra.mxu0 %v163
    %195 = vmatprep.subr.bf16.mxu0 0
    %196 = vmatpush2.bf16.msra.mxu0 0
    %197 = vmatprep.subr.bf16.mxu0 0
    %198 = vmatpush2.bf16.msra.mxu0 0
    %199 = vmatprep.subr.bf16.mxu0 0
    %200 = vmatpush2.bf16.msra.mxu0 0
    %201 = vmatprep.subr.bf16.mxu0 0
    %202 = vmatpush2.bf16.msra.mxu0 0
    %203 = vmatprep.subr.bf16.mxu0 0
    %204 = vmatpush2.bf16.msra.mxu0 0
    %205 = vmatprep.subr.bf16.mxu0 0
    %206 = vmatpush2.bf16.msra.mxu0 0
    %207 = vmatprep.subr.bf16.mxu0 0
    %208 = vmatpush2.bf16.msra.mxu0 0
    %209 = vmatprep.subr.bf16.mxu0 0
    %210 = vmatpush2.bf16.msra.mxu0 0
    %211 = vmatprep.mubr.bf16.mxu0 0
    %212 = vmatmul.mubr.bf16.gmra.mxu0 %v115
    %v213 = vpop.f32.mrf.mxu0
    %v214 = vadd.f32 %v81, %v213
    %v215 = vpop.f32.mrf.mxu0
    %v216 = vpop.f32.mrf.mxu0
    %v217 = vadd.f32 %v81, %v216
    %v218 = vpop.f32.mrf.mxu0
    %219 = vmatprep.mubr.bf16.mxu0 0
    %220 = vmatmul.mubr.bf16.gmra.mxu0 %v116
    %v221 = vpop.f32.mrf.mxu0
    %v222 = vadd.f32 %v81, %v221
    %v223 = vpop.f32.mrf.mxu0
    %v224 = vpop.f32.mrf.mxu0
    %v225 = vadd.f32 %v81, %v224
    %v226 = vpop.f32.mrf.mxu0
    %227 = vmatprep.mubr.bf16.mxu0 0
    %228 = vmatmul.mubr.bf16.gmra.mxu0 %v117
    %v229 = vpop.f32.mrf.mxu0
    %v230 = vadd.f32 %v81, %v229
    %v231 = vpop.f32.mrf.mxu0
    %v232 = vpop.f32.mrf.mxu0
    %v233 = vadd.f32 %v81, %v232
    %v234 = vpop.f32.mrf.mxu0
    %235 = vmatprep.mubr.bf16.mxu0 0
    %236 = vmatmul.mubr.bf16.gmra.mxu0 %v118
    %v237 = vpop.f32.mrf.mxu0
    %v238 = vadd.f32 %v81, %v237
    %v239 = vpop.f32.mrf.mxu0
    %v240 = vpop.f32.mrf.mxu0
    %v241 = vadd.f32 %v81, %v240
    %v242 = vpop.f32.mrf.mxu0
    %243 = vmatprep.mubr.bf16.mxu0 0
    %244 = vmatmul.mubr.bf16.gmra.mxu0 %v119
    %v245 = vpop.f32.mrf.mxu0
    %v246 = vadd.f32 %v81, %v245
    %v247 = vpop.f32.mrf.mxu0
    %v248 = vpop.f32.mrf.mxu0
    %v249 = vadd.f32 %v81, %v248
    %v250 = vpop.f32.mrf.mxu0
    %251 = vmatprep.mubr.bf16.mxu0 0
    %252 = vmatmul.mubr.bf16.gmra.mxu0 %v120
    %v253 = vpop.f32.mrf.mxu0
    %v254 = vadd.f32 %v81, %v253
    %v255 = vpop.f32.mrf.mxu0
    %v256 = vpop.f32.mrf.mxu0
    %v257 = vadd.f32 %v81, %v256
    %v258 = vpop.f32.mrf.mxu0
    %259 = vmatprep.mubr.bf16.mxu0 0
    %260 = vmatmul.mubr.bf16.gmra.mxu0 %v121
    %v261 = vpop.f32.mrf.mxu0
    %v262 = vadd.f32 %v81, %v261
    %v263 = vpop.f32.mrf.mxu0
    %v264 = vpop.f32.mrf.mxu0
    %v265 = vadd.f32 %v81, %v264
    %v266 = vpop.f32.mrf.mxu0
    %267 = vmatprep.mubr.bf16.mxu0 0
    %268 = vmatmul.mubr.bf16.gmra.mxu0 %v122
    %v269 = vpop.f32.mrf.mxu0
    %v270 = vadd.f32 %v81, %v269
    %v271 = vpop.f32.mrf.mxu0
    %v272 = vpop.f32.mrf.mxu0
    %v273 = vadd.f32 %v81, %v272
    %v274 = vpop.f32.mrf.mxu0
    %275 = vdwg.mxu0
    %v276 = vtanh.pop %v214
    %v277 = vtanh.pop %v217
    %v278 = vtanh.pop %v222
    %v279 = vtanh.pop %v225
    %v280 = vtanh.pop %v230
    %v281 = vtanh.pop %v233
    %v282 = vtanh.pop %v238
    %v283 = vtanh.pop %v241
    %v284 = vtanh.pop %v246
    %v285 = vtanh.pop %v249
    %v286 = vtanh.pop %v254
    %v287 = vtanh.pop %v257
    %v288 = vtanh.pop %v262
    %v289 = vtanh.pop %v265
    %v290 = vtanh.pop %v270
    %v291 = vtanh.pop %v273
    %v292 = vpack.c.bf16 %v277, %v276
    %v293 = vpack.c.bf16 %v279, %v278
    %v294 = vpack.c.bf16 %v281, %v280
    %v295 = vpack.c.bf16 %v283, %v282
    %v296 = vpack.c.bf16 %v285, %v284
    %v297 = vpack.c.bf16 %v287, %v286
    %v298 = vpack.c.bf16 %v289, %v288
    %v299 = vpack.c.bf16 %v291, %v290
    %v308 = vunpack.c.l.b16 %v292
    %v309 = vunpack.c.h.b16 %v292
    %v310 = vunpack.c.l.b16 %v293
    %v311 = vunpack.c.h.b16 %v293
    %v312 = vunpack.c.l.b16 %v294
    %v313 = vunpack.c.h.b16 %v294
    %v314 = vunpack.c.l.b16 %v295
    %v315 = vunpack.c.h.b16 %v295
    %v316 = vunpack.c.l.b16 %v296
    %v317 = vunpack.c.h.b16 %v296
    %v318 = vunpack.c.l.b16 %v297
    %v319 = vunpack.c.h.b16 %v297
    %v320 = vunpack.c.l.b16 %v298
    %v321 = vunpack.c.h.b16 %v298
    %v322 = vunpack.c.l.b16 %v299
    %v323 = vunpack.c.h.b16 %v299
    %v324 = vpack.c.b16 %v308, %v308
    %v325 = vpack.c.b16 %v309, %v309
    %v326 = vpack.c.b16 %v310, %v310
    %v327 = vpack.c.b16 %v311, %v311
    %v328 = vpack.c.b16 %v312, %v312
    %v329 = vpack.c.b16 %v313, %v313
    %v330 = vpack.c.b16 %v314, %v314
    %v331 = vpack.c.b16 %v315, %v315
    %v332 = vpack.c.b16 %v316, %v316
    %v333 = vpack.c.b16 %v317, %v317
    %v334 = vpack.c.b16 %v318, %v318
    %v335 = vpack.c.b16 %v319, %v319
    %v336 = vpack.c.b16 %v320, %v320
    %v337 = vpack.c.b16 %v321, %v321
    %v338 = vpack.c.b16 %v322, %v322
    %v339 = vpack.c.b16 %v323, %v323
    %356 = vst [vmem:[#allocation7] sm:$0xf] %v324
    %357 = vst [vmem:[#allocation7 + $0x4] sm:$0xf] %v325
    %358 = vst [vmem:[#allocation7 + $0x8] sm:$0xf] %v326
    %359 = vst [vmem:[#allocation7 + $0xc] sm:$0xf] %v327
    %360 = vst [vmem:[#allocation7 + $0x10] sm:$0xf] %v328
    %361 = vst [vmem:[#allocation7 + $0x14] sm:$0xf] %v329
    %362 = vst [vmem:[#allocation7 + $0x18] sm:$0xf] %v330
    %363 = vst [vmem:[#allocation7 + $0x1c] sm:$0xf] %v331
    %364 = vst [vmem:[#allocation7 + $0x20] sm:$0xf] %v332
    %365 = vst [vmem:[#allocation7 + $0x24] sm:$0xf] %v333
    %366 = vst [vmem:[#allocation7 + $0x28] sm:$0xf] %v334
    %367 = vst [vmem:[#allocation7 + $0x2c] sm:$0xf] %v335
    %368 = vst [vmem:[#allocation7 + $0x30] sm:$0xf] %v336
    %369 = vst [vmem:[#allocation7 + $0x34] sm:$0xf] %v337
    %370 = vst [vmem:[#allocation7 + $0x38] sm:$0xf] %v338
    %371 = vst [vmem:[#allocation7 + $0x3c] sm:$0xf] %v339
    // Predicated region
    $region22: #{tpu_custom_call.1} parent=1 // pred_check
      _
    $region23: #{tpu_custom_call.1} parent=1 // pred_check_branch
      %373 = sbr.rel (0) target = $region25
    $region24: #{tpu_custom_call.1} parent=1 // pred_region
      %s375 = ssub.s32 1024, 1024
      %376 = vsyncadd [#allocation4], %s375
      %s377 = sshll.u32 [#allocation7], 4
      %s378 = int_to_ptr.vmem [resolvable:$true] %s377
      %383 = dma.vmem_to_hbm [thread:$0]  %s378, 1024, %s3, [#allocation4], 64, 64, 4
    $region25: #{tpu_custom_call.1} parent=1 // pred_fallthru
      _
    // Predicated region
    $region26: #{tpu_custom_call.1} parent=1 // pred_check
      _
    $region27: #{tpu_custom_call.1} parent=1 // pred_check_branch
      %385 = sbr.rel (0) target = $region29
    $region28: #{tpu_custom_call.1} parent=1 // pred_region
      %386 = dma.done [#allocation4], 1024
    $region29: #{tpu_custom_call.1} parent=1 // pred_fallthru
      _
    %387 = vsyncpa [#allocation3], 1
    %388 = vsyncpa [#allocation6], 1
    %389 = vsyncpa [#allocation4], 1

</llo_original>
